<compile_context>
chip_gen: v5e
topology: v5e:2x2
jax: 0.10.0
libtpu: 0.0.40
codegen_flags: <defaults>
</compile_context>

<pallas_src>
import functools

import jax
import jax.numpy as jnp
import numpy as np
from jax.experimental import pallas as pl
from jax.experimental.pallas import tpu as pltpu


def _dep_presentation_kernel(window,
                             ids_ref,          # SMEM (N_pad,) int32  (scalar prefetch)
                             tags_ref,         # VMEM (R, T)   f32
                             w1_ref, b1_ref,   # VMEM (T, H1) bf16, (1, H1) f32
                             w2_ref, b2_ref,   # VMEM (H1, H2) bf16, (1, H2) f32
                             table_hbm,        # HBM  (V, E)   f32   (memory_space=pl.ANY)
                             out_ref,          # VMEM (R, E + H2) f32
                             embed_buf,        # VMEM (R, E)   f32 scratch
                             sems):            # DMA semaphores (window,)
    R = tags_ref.shape[0]
    E = embed_buf.shape[1]
    base = pl.program_id(0) * R

    def row_copy(i):
        # Gather one embedding row (nn.Embedding forward is a plain lookup; the
        # padding_idx row of the table is zero by construction, so no mask needed).
        return pltpu.make_async_copy(
            table_hbm.at[ids_ref[base + i]],   # (E,) row in HBM
            embed_buf.at[i],                   # (E,) destination row in VMEM
            sems.at[i % window])

    # Kick off the first `window` embedding-row gathers (stay in flight while
    # the MLP runs on the MXU).
    @pl.loop(0, window)
    def _(i):
        row_copy(i).start()

    # tags_seq: [Linear -> Dropout -> ReLU] x 2, bf16 MXU inputs, f32 accumulate.
    # TODO(synk): nn.Dropout is identity in eval mode; training-mode dropout
    #             (random masking) is not implemented here.
    t = tags_ref[...].astype(jnp.bfloat16)
    h1 = jnp.dot(t, w1_ref[...], preferred_element_type=jnp.float32) + b1_ref[...]
    h1 = jnp.maximum(h1, 0.0)
    h2 = jnp.dot(h1.astype(jnp.bfloat16), w2_ref[...],
                 preferred_element_type=jnp.float32) + b2_ref[...]
    h2 = jnp.maximum(h2, 0.0)
    # torch.cat(..., dim=2) -> direct slice store into the upper lane range.
    out_ref[:, E:] = h2.astype(out_ref.dtype)

    # Drain the gather with a rolling window of in-flight DMAs: wait row i,
    # then start row i + window (at most one outstanding copy per semaphore).
    @pl.loop(0, R)
    def _(i):
        row_copy(i).wait()

        @pl.when(i + window < R)
        def _():
            row_copy(i + window).start()

    # Embedding half -> lower lane range of the output block.
    out_ref[:, :E] = embed_buf[...].astype(out_ref.dtype)


def dep_presentation_forward(dep_ids, table, tags, w1, b1, w2, b2,
                             *, padding_idx=0, row_tile=128, gather_window=16):
    # padding_idx is not needed in forward: nn.Embedding's forward is a plain
    # gather and its padding row is zeroed at init (as the caller guarantees).
    del padding_idx
    B, S = dep_ids.shape
    V, E = table.shape
    T = tags.shape[-1]
    H1 = w1.shape[1]
    H2 = w2.shape[1]
    out_dim = E + H2

    N = B * S
    num_tiles = -(-N // row_tile)
    N_pad = num_tiles * row_tile
    window = max(1, min(gather_window, row_tile))

    # Flatten (B, S) -> rows and pad to a whole number of row tiles.
    ids_flat = jnp.pad(dep_ids.reshape(N).astype(jnp.int32), (0, N_pad - N))
    tags_flat = jnp.pad(tags.reshape(N, T).astype(jnp.float32),
                        ((0, N_pad - N), (0, 0)))
    w1_b = w1.astype(jnp.bfloat16)
    w2_b = w2.astype(jnp.bfloat16)
    b1_2d = b1.reshape(1, H1).astype(jnp.float32)
    b2_2d = b2.reshape(1, H2).astype(jnp.float32)

    kernel = functools.partial(_dep_presentation_kernel, window)

    grid_spec = pltpu.PrefetchScalarGridSpec(
        num_scalar_prefetch=1,                     # dep_ids -> SMEM
        grid=(num_tiles,),
        in_specs=[
            pl.BlockSpec((row_tile, T), lambda r, ids: (r, 0)),   # tags row tile
            pl.BlockSpec((T, H1), lambda r, ids: (0, 0)),         # W1 (bf16)
            pl.BlockSpec((1, H1), lambda r, ids: (0, 0)),         # b1 (f32)
            pl.BlockSpec((H1, H2), lambda r, ids: (0, 0)),        # W2 (bf16)
            pl.BlockSpec((1, H2), lambda r, ids: (0, 0)),         # b2 (f32)
            pl.BlockSpec(memory_space=pl.ANY),                    # embedding table in HBM
        ],
        out_specs=pl.BlockSpec((row_tile, out_dim), lambda r, ids: (r, 0)),
        scratch_shapes=[
            pltpu.VMEM((row_tile, E), jnp.float32),               # gathered embeddings
            pltpu.SemaphoreType.DMA((window,)),                   # gather DMA sems
        ],
    )

    out_flat = pl.pallas_call(
        kernel,
        out_shape=jax.ShapeDtypeStruct((N_pad, out_dim), jnp.float32),
        grid_spec=grid_spec,
        compiler_params=pltpu.CompilerParams(
            dimension_semantics=("parallel",)),
    )(ids_flat, tags_flat, w1_b, b1_2d, w2_b, b2_2d, table.astype(jnp.float32))

    return out_flat[:N].reshape(B, S, out_dim)


if __name__ == "__main__":
    key = jax.random.PRNGKey(0)

    # Small shapes consistent with the module's forward signature (lane-friendly
    # feature dims; N = B*S = 300 -> 3 row tiles of 128 with tail padding).
    B, S = 3, 100
    vocab_size, embed_size, padding_idx = 1000, 128, 0
    tags_linear_sizes = (16, 128, 128)       # tags_num -> hidden -> tag_out_size
    T, H1, H2 = tags_linear_sizes

    k1, k2, k3, k4, k5, k6, k7 = jax.random.split(key, 7)
    table = jax.random.normal(k1, (vocab_size, embed_size), jnp.float32)
    table = table.at[padding_idx].set(0.0)   # nn.Embedding zeros the padding row
    dep_ids = jax.random.randint(k2, (B, S), 0, vocab_size, jnp.int32)
    dep_ids = dep_ids.at[0, :3].set(padding_idx)   # exercise padding tokens
    tags = jax.random.normal(k3, (B, S, T), jnp.float32)
    w1 = jax.random.normal(k4, (T, H1), jnp.float32) * (1.0 / np.sqrt(T))
    b1 = jax.random.normal(k5, (H1,), jnp.float32) * 0.01
    w2 = jax.random.normal(k6, (H1, H2), jnp.float32) * (1.0 / np.sqrt(H1))
    b2 = jax.random.normal(k7, (H2,), jnp.float32) * 0.01

    out = dep_presentation_forward(dep_ids, table, tags, w1, b1, w2, b2,
                                   padding_idx=padding_idx)
    out = jax.block_until_ready(out)

    # Pure-JAX reference (eval-mode semantics: dropout = identity), using the
    # same bf16-operand / f32-accumulate matmul rounding as the kernel.
    embed_ref = table[dep_ids]
    w1_bref = w1.astype(jnp.bfloat16)
    w2_bref = w2.astype(jnp.bfloat16)
    h1 = jax.nn.relu(jnp.dot(tags.astype(jnp.bfloat16), w1_bref,
                             preferred_element_type=jnp.float32) + b1)
    h2 = jax.nn.relu(jnp.dot(h1.astype(jnp.bfloat16), w2_bref,
                             preferred_element_type=jnp.float32) + b2)
    ref = jnp.concatenate([embed_ref, h2], axis=-1)

    np.testing.assert_allclose(np.asarray(out), np.asarray(ref), rtol=1e-3, atol=1e-3)
    print("KERNEL_OK")
</pallas_src>

<mosaic_0001>
module attributes {stable_mosaic.version = 11 : i64} {
  func.func @_dep_presentation_kernel(%arg0: i32, %arg1: memref<384xi32, #tpu.memory_space<smem>>, %arg2: memref<128x16xf32, #tpu.memory_space<vmem>>, %arg3: memref<16x128xbf16, #tpu.memory_space<vmem>>, %arg4: memref<1x128xf32, #tpu.memory_space<vmem>>, %arg5: memref<128x128xbf16, #tpu.memory_space<vmem>>, %arg6: memref<1x128xf32, #tpu.memory_space<vmem>>, %arg7: memref<1000x128xf32, #tpu.memory_space<any>>, %arg8: memref<128x256xf32, #tpu.memory_space<vmem>>, %arg9: memref<128x128xf32, #tpu.memory_space<vmem>>, %arg10: memref<16x!tpu.dma_semaphore, #tpu.memory_space<semaphore_mem>>) attributes {dimension_semantics = [#tpu.dimension_semantics<parallel>], iteration_bounds = array<i64: 3>, scalar_prefetch = 1 : i64, scratch_operands = 2 : i64, tpu.core_type = #tpu.core_type<tc>, window_params = [{transform_indices = @transform_0, window_bounds = array<i64: 128, 16>}, {pipeline_mode = #tpu.pipeline_mode<synchronous>, transform_indices = @transform_1, window_bounds = array<i64: 16, 128>}, {pipeline_mode = #tpu.pipeline_mode<synchronous>, transform_indices = @transform_2, window_bounds = array<i64: 1, 128>}, {pipeline_mode = #tpu.pipeline_mode<synchronous>, transform_indices = @transform_3, window_bounds = array<i64: 128, 128>}, {pipeline_mode = #tpu.pipeline_mode<synchronous>, transform_indices = @transform_4, window_bounds = array<i64: 1, 128>}, {}, {transform_indices = @transform_6, window_bounds = array<i64: 128, 256>}]} {
    %c128_i32 = arith.constant 128 : i32
    %0 = arith.muli %arg0, %c128_i32 : i32
    %c0_i32 = arith.constant 0 : i32
    %c16_i32 = arith.constant 16 : i32
    %1 = arith.addi %c0_i32, %c16_i32 : i32
    %c1_i32 = arith.constant 1 : i32
    scf.for %arg11 = %c0_i32 to %1 step %c1_i32  : i32 {
      %c1_i32_22 = arith.constant 1 : i32
      %23 = arith.muli %arg11, %c1_i32_22 : i32
      %c0_i32_23 = arith.constant 0 : i32
      %24 = arith.addi %c0_i32_23, %23 : i32
      %25 = arith.addi %0, %24 : i32
      %26 = arith.index_cast %25 : i32 to index
      %27 = memref.load %arg1[%26] : memref<384xi32, #tpu.memory_space<smem>>
      %c16_i32_24 = arith.constant 16 : i32
      %c0_i32_25 = arith.constant 0 : i32
      %28 = arith.cmpi eq, %c16_i32_24, %c0_i32_25 : i32
      %c1_i32_26 = arith.constant 1 : i32
      %29 = arith.select %28, %c1_i32_26, %c16_i32_24 : i32
      %30 = arith.remsi %24, %29 : i32
      %c0_i32_27 = arith.constant 0 : i32
      %31 = arith.cmpi ne, %30, %c0_i32_27 : i32
      %c0_i32_28 = arith.constant 0 : i32
      %32 = arith.cmpi slt, %30, %c0_i32_28 : i32
      %c0_i32_29 = arith.constant 0 : i32
      %33 = arith.cmpi slt, %29, %c0_i32_29 : i32
      %34 = arith.xori %32, %33 : i1
      %35 = arith.andi %34, %31 : i1
      %36 = arith.addi %30, %29 : i32
      %37 = arith.select %35, %36, %30 : i32
      %c0_i32_30 = arith.constant 0 : i32
      %38 = tpu.memref_slice %arg7[%27, %c0_i32_30] : memref<1000x128xf32, #tpu.memory_space<any>> -> memref<1x128xf32, #tpu.memory_space<any>>
      %39 = tpu.memref_squeeze %38 : memref<1x128xf32, #tpu.memory_space<any>> -> memref<128xf32, #tpu.memory_space<any>>
      %c0_i32_31 = arith.constant 0 : i32
      %40 = tpu.memref_slice %arg9[%24, %c0_i32_31] : memref<128x128xf32, #tpu.memory_space<vmem>> -> memref<1x128xf32, #tpu.memory_space<vmem>>
      %41 = tpu.memref_squeeze %40 : memref<1x128xf32, #tpu.memory_space<vmem>> -> memref<128xf32, #tpu.memory_space<vmem>>
      %42 = tpu.memref_slice %arg10[%37] : memref<16x!tpu.dma_semaphore, #tpu.memory_space<semaphore_mem>> -> memref<1x!tpu.dma_semaphore, #tpu.memory_space<semaphore_mem>>
      %43 = tpu.memref_squeeze %42 : memref<1x!tpu.dma_semaphore, #tpu.memory_space<semaphore_mem>> -> memref<!tpu.dma_semaphore, #tpu.memory_space<semaphore_mem>>
      tpu.enqueue_dma source(%39 : memref<128xf32, #tpu.memory_space<any>>) target(%41 : memref<128xf32, #tpu.memory_space<vmem>>) target_semaphore(%43 : memref<!tpu.dma_semaphore, #tpu.memory_space<semaphore_mem>>)
    }
    %c16_i32_0 = arith.constant 16 : i32
    %c0 = arith.constant 0 : index
    %c0_1 = arith.constant 0 : index
    %2 = vector.load %arg2[%c0, %c0_1] : memref<128x16xf32, #tpu.memory_space<vmem>>, vector<128x16xf32>
    %3 = arith.truncf %2 : vector<128x16xf32> to vector<128x16xbf16>
    %c0_2 = arith.constant 0 : index
    %c0_3 = arith.constant 0 : index
    %4 = vector.load %arg3[%c0_2, %c0_3] : memref<16x128xbf16, #tpu.memory_space<vmem>>, vector<16x128xbf16>
    %cst = arith.constant dense<0.000000e+00> : vector<128x128xf32>
    %5 = tpu.matmul %3, %4, %cst {dimension_numbers = #tpu.dot_dimension_numbers<[1], [0], [0], [1], [0, 0, 1, 1], [], []>} : vector<128x16xbf16>, vector<16x128xbf16>, vector<128x128xf32> -> vector<128x128xf32>
    %c0_4 = arith.constant 0 : index
    %c0_5 = arith.constant 0 : index
    %6 = vector.load %arg4[%c0_4, %c0_5] : memref<1x128xf32, #tpu.memory_space<vmem>>, vector<1x128xf32>
    %7 = vector.broadcast %6 : vector<1x128xf32> to vector<128x128xf32>
    %8 = arith.addf %5, %7 : vector<128x128xf32>
    %cst_6 = arith.constant 0.000000e+00 : f32
    %9 = vector.broadcast %cst_6 : f32 to vector<128x128xf32>
    %10 = arith.maximumf %8, %9 : vector<128x128xf32>
    %11 = arith.truncf %10 : vector<128x128xf32> to vector<128x128xbf16>
    %c0_7 = arith.constant 0 : index
    %c0_8 = arith.constant 0 : index
    %12 = vector.load %arg5[%c0_7, %c0_8] : memref<128x128xbf16, #tpu.memory_space<vmem>>, vector<128x128xbf16>
    %cst_9 = arith.constant dense<0.000000e+00> : vector<128x128xf32>
    %13 = tpu.matmul %11, %12, %cst_9 {dimension_numbers = #tpu.dot_dimension_numbers<[1], [0], [0], [1], [0, 0, 1, 1], [], []>} : vector<128x128xbf16>, vector<128x128xbf16>, vector<128x128xf32> -> vector<128x128xf32>
    %c0_10 = arith.constant 0 : index
    %c0_11 = arith.constant 0 : index
    %14 = vector.load %arg6[%c0_10, %c0_11] : memref<1x128xf32, #tpu.memory_space<vmem>>, vector<1x128xf32>
    %15 = vector.broadcast %14 : vector<1x128xf32> to vector<128x128xf32>
    %16 = arith.addf %13, %15 : vector<128x128xf32>
    %cst_12 = arith.constant 0.000000e+00 : f32
    %17 = vector.broadcast %cst_12 : f32 to vector<128x128xf32>
    %18 = arith.maximumf %16, %17 : vector<128x128xf32>
    %c0_13 = arith.constant 0 : index
    %c128 = arith.constant 128 : index
    %19 = vector.load %arg8[%c0_13, %c128] : memref<128x256xf32, #tpu.memory_space<vmem>>, vector<128x128xf32>
    tpu.vector_store %arg8[%c0_13, %c128], %18 {strides = array<i32>} : memref<128x256xf32, #tpu.memory_space<vmem>>, vector<128x128xf32>,
    %c0_i32_14 = arith.constant 0 : i32
    %c128_i32_15 = arith.constant 128 : i32
    %20 = arith.addi %c0_i32_14, %c128_i32_15 : i32
    %c1_i32_16 = arith.constant 1 : i32
    scf.for %arg11 = %c0_i32_14 to %20 step %c1_i32_16  : i32 {
      %c1_i32_22 = arith.constant 1 : i32
      %23 = arith.muli %arg11, %c1_i32_22 : i32
      %c0_i32_23 = arith.constant 0 : i32
      %24 = arith.addi %c0_i32_23, %23 : i32
      %25 = arith.addi %0, %24 : i32
      %26 = arith.index_cast %25 : i32 to index
      %27 = memref.load %arg1[%26] : memref<384xi32, #tpu.memory_space<smem>>
      %c16_i32_24 = arith.constant 16 : i32
      %c0_i32_25 = arith.constant 0 : i32
      %28 = arith.cmpi eq, %c16_i32_24, %c0_i32_25 : i32
      %c1_i32_26 = arith.constant 1 : i32
      %29 = arith.select %28, %c1_i32_26, %c16_i32_24 : i32
      %30 = arith.remsi %24, %29 : i32
      %c0_i32_27 = arith.constant 0 : i32
      %31 = arith.cmpi ne, %30, %c0_i32_27 : i32
      %c0_i32_28 = arith.constant 0 : i32
      %32 = arith.cmpi slt, %30, %c0_i32_28 : i32
      %c0_i32_29 = arith.constant 0 : i32
      %33 = arith.cmpi slt, %29, %c0_i32_29 : i32
      %34 = arith.xori %32, %33 : i1
      %35 = arith.andi %34, %31 : i1
      %36 = arith.addi %30, %29 : i32
      %37 = arith.select %35, %36, %30 : i32
      %c0_i32_30 = arith.constant 0 : i32
      %38 = tpu.memref_slice %arg7[%27, %c0_i32_30] : memref<1000x128xf32, #tpu.memory_space<any>> -> memref<1x128xf32, #tpu.memory_space<any>>
      %39 = tpu.memref_squeeze %38 : memref<1x128xf32, #tpu.memory_space<any>> -> memref<128xf32, #tpu.memory_space<any>>
      %c0_i32_31 = arith.constant 0 : i32
      %40 = tpu.memref_slice %arg9[%24, %c0_i32_31] : memref<128x128xf32, #tpu.memory_space<vmem>> -> memref<1x128xf32, #tpu.memory_space<vmem>>
      %41 = tpu.memref_squeeze %40 : memref<1x128xf32, #tpu.memory_space<vmem>> -> memref<128xf32, #tpu.memory_space<vmem>>
      %42 = tpu.memref_slice %arg10[%37] : memref<16x!tpu.dma_semaphore, #tpu.memory_space<semaphore_mem>> -> memref<1x!tpu.dma_semaphore, #tpu.memory_space<semaphore_mem>>
      %43 = tpu.memref_squeeze %42 : memref<1x!tpu.dma_semaphore, #tpu.memory_space<semaphore_mem>> -> memref<!tpu.dma_semaphore, #tpu.memory_space<semaphore_mem>>
      tpu.wait_dma2 semaphore(%43 : memref<!tpu.dma_semaphore, #tpu.memory_space<semaphore_mem>>) src(%39 : memref<128xf32, #tpu.memory_space<any>>) dst(%41 : memref<128xf32, #tpu.memory_space<vmem>>)
      %c16_i32_32 = arith.constant 16 : i32
      %44 = arith.addi %24, %c16_i32_32 : i32
      %c128_i32_33 = arith.constant 128 : i32
      %45 = arith.cmpi slt, %44, %c128_i32_33 : i32
      %46 = arith.extui %45 : i1 to i32
      %c0_i32_34 = arith.constant 0 : i32
      %47 = arith.cmpi ne, %46, %c0_i32_34 : i32
      scf.if %47 {
        %c16_i32_35 = arith.constant 16 : i32
        %48 = arith.addi %24, %c16_i32_35 : i32
        %49 = arith.addi %0, %48 : i32
        %50 = arith.index_cast %49 : i32 to index
        %51 = memref.load %arg1[%50] : memref<384xi32, #tpu.memory_space<smem>>
        %c16_i32_36 = arith.constant 16 : i32
        %c0_i32_37 = arith.constant 0 : i32
        %52 = arith.cmpi eq, %c16_i32_36, %c0_i32_37 : i32
        %c1_i32_38 = arith.constant 1 : i32
        %53 = arith.select %52, %c1_i32_38, %c16_i32_36 : i32
        %54 = arith.remsi %48, %53 : i32
        %c0_i32_39 = arith.constant 0 : i32
        %55 = arith.cmpi ne, %54, %c0_i32_39 : i32
        %c0_i32_40 = arith.constant 0 : i32
        %56 = arith.cmpi slt, %54, %c0_i32_40 : i32
        %c0_i32_41 = arith.constant 0 : i32
        %57 = arith.cmpi slt, %53, %c0_i32_41 : i32
        %58 = arith.xori %56, %57 : i1
        %59 = arith.andi %58, %55 : i1
        %60 = arith.addi %54, %53 : i32
        %61 = arith.select %59, %60, %54 : i32
        %c0_i32_42 = arith.constant 0 : i32
        %62 = tpu.memref_slice %arg7[%51, %c0_i32_42] : memref<1000x128xf32, #tpu.memory_space<any>> -> memref<1x128xf32, #tpu.memory_space<any>>
        %63 = tpu.memref_squeeze %62 : memref<1x128xf32, #tpu.memory_space<any>> -> memref<128xf32, #tpu.memory_space<any>>
        %c0_i32_43 = arith.constant 0 : i32
        %64 = tpu.memref_slice %arg9[%48, %c0_i32_43] : memref<128x128xf32, #tpu.memory_space<vmem>> -> memref<1x128xf32, #tpu.memory_space<vmem>>
        %65 = tpu.memref_squeeze %64 : memref<1x128xf32, #tpu.memory_space<vmem>> -> memref<128xf32, #tpu.memory_space<vmem>>
        %66 = tpu.memref_slice %arg10[%61] : memref<16x!tpu.dma_semaphore, #tpu.memory_space<semaphore_mem>> -> memref<1x!tpu.dma_semaphore, #tpu.memory_space<semaphore_mem>>
        %67 = tpu.memref_squeeze %66 : memref<1x!tpu.dma_semaphore, #tpu.memory_space<semaphore_mem>> -> memref<!tpu.dma_semaphore, #tpu.memory_space<semaphore_mem>>
        tpu.enqueue_dma source(%63 : memref<128xf32, #tpu.memory_space<any>>) target(%65 : memref<128xf32, #tpu.memory_space<vmem>>) target_semaphore(%67 : memref<!tpu.dma_semaphore, #tpu.memory_space<semaphore_mem>>)
      } else {
      }
    }
    %c128_i32_17 = arith.constant 128 : i32
    %c0_18 = arith.constant 0 : index
    %c0_19 = arith.constant 0 : index
    %21 = vector.load %arg9[%c0_18, %c0_19] : memref<128x128xf32, #tpu.memory_space<vmem>>, vector<128x128xf32>
    %c0_20 = arith.constant 0 : index
    %c0_21 = arith.constant 0 : index
    %22 = vector.load %arg8[%c0_20, %c0_21] : memref<128x256xf32, #tpu.memory_space<vmem>>, vector<128x128xf32>
    tpu.vector_store %arg8[%c0_20, %c0_21], %21 {strides = array<i32>} : memref<128x256xf32, #tpu.memory_space<vmem>>, vector<128x128xf32>,
    return
  }
  func.func @transform_0(%arg0: i32, %arg1: memref<384xi32, #tpu.memory_space<smem>>) -> (i32, i32) {
    %c0_i32 = arith.constant 0 : i32
    %c0_i32_0 = arith.constant 0 : i32
    return %arg0, %c0_i32 : i32, i32
  }
  func.func @transform_1(%arg0: i32, %arg1: memref<384xi32, #tpu.memory_space<smem>>) -> (i32, i32) {
    %c0_i32 = arith.constant 0 : i32
    %c0_i32_0 = arith.constant 0 : i32
    %c0_i32_1 = arith.constant 0 : i32
    return %c0_i32, %c0_i32_0 : i32, i32
  }
  func.func @transform_2(%arg0: i32, %arg1: memref<384xi32, #tpu.memory_space<smem>>) -> (i32, i32) {
    %c0_i32 = arith.constant 0 : i32
    %c0_i32_0 = arith.constant 0 : i32
    %c0_i32_1 = arith.constant 0 : i32
    return %c0_i32, %c0_i32_0 : i32, i32
  }
  func.func @transform_3(%arg0: i32, %arg1: memref<384xi32, #tpu.memory_space<smem>>) -> (i32, i32) {
    %c0_i32 = arith.constant 0 : i32
    %c0_i32_0 = arith.constant 0 : i32
    %c0_i32_1 = arith.constant 0 : i32
    return %c0_i32, %c0_i32_0 : i32, i32
  }
  func.func @transform_4(%arg0: i32, %arg1: memref<384xi32, #tpu.memory_space<smem>>) -> (i32, i32) {
    %c0_i32 = arith.constant 0 : i32
    %c0_i32_0 = arith.constant 0 : i32
    %c0_i32_1 = arith.constant 0 : i32
    return %c0_i32, %c0_i32_0 : i32, i32
  }
  func.func @transform_6(%arg0: i32, %arg1: memref<384xi32, #tpu.memory_space<smem>>) -> (i32, i32) {
    %c0_i32 = arith.constant 0 : i32
    %c0_i32_0 = arith.constant 0 : i32
    return %arg0, %c0_i32 : i32, i32
  }
}

</mosaic_0001>

<llo_original>
// kernel: tpu_custom_call.1
$region0: #{tpu_custom_call.1}
  #allocation0 [shape = 'u32[]', space=smem, size = 0x4, offset = 0x4, fixed_abs, tag = 'smem constant byte address 0x4 - core index']
  #allocation1 [shape = 'u32[72,128]{1,0:T(1,128)}', space=vmem, size = 0x9000, scoped, tag = 'internal scratch']
  #allocation2 [shape = 'f32[128,128]{1,0:T(8,128)}', space=vmem, size = 0x10000, scoped, tag = 'scratch operand']
  #allocation3 [shape = 's32[16]{0}', space=sflag, size = 0x40, scoped, tag = 'scratch operand']
  #allocation4 [shape = 's32[1]{0}', space=sflag, size = 0x4, scoped, tag = 'scoped memory for tpu_custom_call.1']
  #allocation5 [shape = 'u8[1536]{0}', space=smem, size = 0x600, scoped, tag = 'prefetched SMEM operand 0']
  #allocation8 [shape = 's32[]', space=sflag, size = 0x4, offset = 0, fixed_abs, tag = 'sflag constant byte address 0x0 - dummy sync flag']
  #allocation9 [shape = 's32[]', space=sflag, size = 0x4, offset = 0, fixed_abs, tag = 'sflag constant byte address 0x0 - dummy sync flag']
  #allocation10 [shape = 'u32[]', space=smem, size = 0x4, offset = 0x44, fixed_abs, tag = 'smem constant byte address 0x44 - assertion arg 0']
  #allocation11 [shape = 'u32[]', space=smem, size = 0x4, offset = 0x48, fixed_abs, tag = 'smem constant byte address 0x48 - assertion arg 1']
  #allocation12 [shape = 's32[]', space=sflag, size = 0x4, offset = 0, fixed_abs, tag = 'sflag constant byte address 0x0 - dummy sync flag']
  #allocation13 [shape = 's32[]', space=sflag, size = 0x4, offset = 0, fixed_abs, tag = 'sflag constant byte address 0x0 - dummy sync flag']
  %s0 = inlined_call_operand.vmem [shape: s32[384], index: 0, kind: input, shape index: {}]
  %s1 = inlined_call_operand.vmem [shape: f32[384,16], index: 1, kind: input, shape index: {}]
  %s2 = inlined_call_operand.vmem [shape: bf16[16,128], index: 2, kind: input, shape index: {}]
  %s3 = inlined_call_operand.vmem [shape: f32[1,128], index: 3, kind: input, shape index: {}]
  %s4 = inlined_call_operand.vmem [shape: bf16[128,128], index: 4, kind: input, shape index: {}]
  %s5 = inlined_call_operand.vmem [shape: f32[1,128], index: 5, kind: input, shape index: {}]
  %s6 = inlined_call_operand.hbm [shape: f32[1000,128], index: 6, kind: input, shape index: {}]
  %s7 = inlined_call_operand.hbm [shape: f32[384,256], index: 7, kind: output, shape index: {}]
  %s8 = sld [smem:[#allocation0]]
  $region79: #{tpu_custom_call.1} parent=0
    _
  %s10 = ssub.s32 1, %s8
  %s11 = scalar_select 0, %s10, %s8
  %s13 = sshll.u32 %s0, 4
  %s14 = int_to_ptr.vmem [resolvable:$true] %s13
  %16 = dma.vmem_to_smem %s14, 48, [#allocation5], [#allocation4]
  %18 = dma.done [#allocation4], 48
  %19 = sfence
  $region1: #{tpu_custom_call.1} parent=0
    #allocation6 [shape = 'u8[262144]{0}', space=vmem, size = 0x40000, scoped, tag = 'output window, operand 0']
    #allocation7 [shape = 's32[2]{0}', space=sflag, size = 0x8, scoped, tag = 'scoped memory for tpu_custom_call.1']
    %20 = vsyncpa [#allocation7], 0
    %s21 = scalar_lea.sflag [#allocation7], 1
    %22 = vsyncpa %s21, 0
    loop: start=0, step=1, limit=5
    $region2: #{tpu_custom_call.1} parent=1 // loop_pre_header
      _
    $region3: #{tpu_custom_call.1} parent=1 // loop_header
      %s24 = sphi 0, %s28
      %p25 = scmp.ge.s32.totalorder %s24, 5
      %s34 = sphi 0, %s36
      %s37 = sphi 0, %s34
      %s38 = sphi 0, %s37
      %s54 = sphi 0, %s38
      %s58 = sphi 0, %s58
      %s60 = sphi 0, %s58
      %s61 = sphi 0, %s60
      %s75 = sphi 0, %s61
      %s79 = sphi 0, %s79
      %s81 = sphi 0, %s79
      %s82 = sphi 0, %s81
      %s96 = sphi 0, %s82
      %s100 = sphi 0, %s100
      %s102 = sphi 0, %s100
      %s103 = sphi 0, %s102
      %s117 = sphi 0, %s103
      %s121 = sphi 0, %s121
      %s123 = sphi 0, %s121
      %s124 = sphi 0, %s123
      %s138 = sphi 0, %s124
      %s144 = sphi 0, %s146
      %s147 = sphi 0, %s144
      %s148 = sphi 0, %s147
      %s164 = sphi 0, %s148
    $region4: #{tpu_custom_call.1} parent=1 // loop_header_branch
      %27 = sbr.rel (%p25) target = $region8
    $region5: #{tpu_custom_call.1} parent=1 // loop_body
      %s29 = ssub.s32 %s24, 1
      %s30 = ssub.s32 %s24, 2
      %s31 = sadd.s32 %s24, 1
      %s32 = ssub.s32 %s24, %s31
      %p33 = scmp.eq.s32.totalorder %s32, 0
      %s35 = sadd.s32 %s34, 1
      %s36 = scalar_select %p33, %s34, %s35
      %p39 = pneg %p33
      %p40 = scmp.eq.s32.totalorder %s24, 2
      %p41 = por %p39, %p40
      %p42 = scmp.ne.s32.totalorder %s34, %s37
      %p43 = scmp.eq.s32.totalorder %s24, 0
      %p44 = por %p42, %p43
      %p45 = scmp.ne.s32.totalorder %s34, %s37
      %p46 = scmp.eq.s32.totalorder %s29, 2
      %p47 = por %p45, %p46
      %p48 = scmp.ne.s32.totalorder %s37, %s38
      %p49 = scmp.eq.s32.totalorder %s29, 0
      %p50 = por %p48, %p49
      %p51 = scmp.ne.s32.totalorder %s37, %s38
      %p52 = scmp.eq.s32.totalorder %s30, 2
      %p53 = por %p51, %p52
      %p55 = scmp.ne.s32.totalorder %s38, %s54
      %p56 = scmp.eq.s32.totalorder %s30, 0
      %p57 = por %p55, %p56
      %s59 = sadd.s32 %s58, 1
      %p62 = scmp.eq.s32.totalorder %s24, 2
      %p63 = scmp.ne.s32.totalorder %s58, %s60
      %p64 = scmp.eq.s32.totalorder %s24, 0
      %p65 = por %p63, %p64
      %p66 = scmp.ne.s32.totalorder %s58, %s60
      %p67 = scmp.eq.s32.totalorder %s29, 2
      %p68 = por %p66, %p67
      %p69 = scmp.ne.s32.totalorder %s60, %s61
      %p70 = scmp.eq.s32.totalorder %s29, 0
      %p71 = por %p69, %p70
      %p72 = scmp.ne.s32.totalorder %s60, %s61
      %p73 = scmp.eq.s32.totalorder %s30, 2
      %p74 = por %p72, %p73
      %p76 = scmp.ne.s32.totalorder %s61, %s75
      %p77 = scmp.eq.s32.totalorder %s30, 0
      %p78 = por %p76, %p77
      %s80 = sadd.s32 %s79, 1
      %p83 = scmp.eq.s32.totalorder %s24, 2
      %p84 = scmp.ne.s32.totalorder %s79, %s81
      %p85 = scmp.eq.s32.totalorder %s24, 0
      %p86 = por %p84, %p85
      %p87 = scmp.ne.s32.totalorder %s79, %s81
      %p88 = scmp.eq.s32.totalorder %s29, 2
      %p89 = por %p87, %p88
      %p90 = scmp.ne.s32.totalorder %s81, %s82
      %p91 = scmp.eq.s32.totalorder %s29, 0
      %p92 = por %p90, %p91
      %p93 = scmp.ne.s32.totalorder %s81, %s82
      %p94 = scmp.eq.s32.totalorder %s30, 2
      %p95 = por %p93, %p94
      %p97 = scmp.ne.s32.totalorder %s82, %s96
      %p98 = scmp.eq.s32.totalorder %s30, 0
      %p99 = por %p97, %p98
      %s101 = sadd.s32 %s100, 1
      %p104 = scmp.eq.s32.totalorder %s24, 2
      %p105 = scmp.ne.s32.totalorder %s100, %s102
      %p106 = scmp.eq.s32.totalorder %s24, 0
      %p107 = por %p105, %p106
      %p108 = scmp.ne.s32.totalorder %s100, %s102
      %p109 = scmp.eq.s32.totalorder %s29, 2
      %p110 = por %p108, %p109
      %p111 = scmp.ne.s32.totalorder %s102, %s103
      %p112 = scmp.eq.s32.totalorder %s29, 0
      %p113 = por %p111, %p112
      %p114 = scmp.ne.s32.totalorder %s102, %s103
      %p115 = scmp.eq.s32.totalorder %s30, 2
      %p116 = por %p114, %p115
      %p118 = scmp.ne.s32.totalorder %s103, %s117
      %p119 = scmp.eq.s32.totalorder %s30, 0
      %p120 = por %p118, %p119
      %s122 = sadd.s32 %s121, 1
      %p125 = scmp.eq.s32.totalorder %s24, 2
      %p126 = scmp.ne.s32.totalorder %s121, %s123
      %p127 = scmp.eq.s32.totalorder %s24, 0
      %p128 = por %p126, %p127
      %p129 = scmp.ne.s32.totalorder %s121, %s123
      %p130 = scmp.eq.s32.totalorder %s29, 2
      %p131 = por %p129, %p130
      %p132 = scmp.ne.s32.totalorder %s123, %s124
      %p133 = scmp.eq.s32.totalorder %s29, 0
      %p134 = por %p132, %p133
      %p135 = scmp.ne.s32.totalorder %s123, %s124
      %p136 = scmp.eq.s32.totalorder %s30, 2
      %p137 = por %p135, %p136
      %p139 = scmp.ne.s32.totalorder %s124, %s138
      %p140 = scmp.eq.s32.totalorder %s30, 0
      %p141 = por %p139, %p140
      %s142 = ssub.s32 %s24, %s31
      %p143 = scmp.eq.s32.totalorder %s142, 0
      %s145 = sadd.s32 %s144, 1
      %s146 = scalar_select %p143, %s144, %s145
      %p149 = pneg %p143
      %p150 = scmp.eq.s32.totalorder %s24, 2
      %p151 = por %p149, %p150
      %p152 = scmp.ne.s32.totalorder %s144, %s147
      %p153 = scmp.eq.s32.totalorder %s24, 0
      %p154 = por %p152, %p153
      %p155 = scmp.ne.s32.totalorder %s144, %s147
      %p156 = scmp.eq.s32.totalorder %s29, 2
      %p157 = por %p155, %p156
      %p158 = scmp.ne.s32.totalorder %s147, %s148
      %p159 = scmp.eq.s32.totalorder %s29, 0
      %p160 = por %p158, %p159
      %p161 = scmp.ne.s32.totalorder %s147, %s148
      %p162 = scmp.eq.s32.totalorder %s30, 2
      %p163 = por %p161, %p162
      %p165 = scmp.ne.s32.totalorder %s148, %s164
      %p166 = scmp.eq.s32.totalorder %s30, 0
      %p167 = por %p165, %p166
      %p168 = scmp.le.s32.totalorder 1, %s24
      %p169 = scmp.lt.s32.totalorder %s24, 4
      %p170 = pnand %p168, %p169
      %p171 = pneg %p170
      // Predicated region
      $region9: #{tpu_custom_call.1} parent=5 // pred_check
        _
      $region10: #{tpu_custom_call.1} parent=5 // pred_check_branch
        %173 = sbr.rel (%p170) target = $region12
      $region11: #{tpu_custom_call.1} parent=5 // pred_region
        %s174 = ssub.s32 %s24, 1
        // Predicated region
        $region13: #{tpu_custom_call.1} parent=11 // pred_check
          %p175 = pneg %p71
        $region14: #{tpu_custom_call.1} parent=11 // pred_check_branch
          %177 = sbr.rel (%p175) target = $region16
        $region15: #{tpu_custom_call.1} parent=11 // pred_region
          _
        $region16: #{tpu_custom_call.1} parent=11 // pred_fallthru
          _
        // Predicated region
        $region17: #{tpu_custom_call.1} parent=11 // pred_check
          %p178 = pneg %p92
        $region18: #{tpu_custom_call.1} parent=11 // pred_check_branch
          %180 = sbr.rel (%p178) target = $region20
        $region19: #{tpu_custom_call.1} parent=11 // pred_region
          _
        $region20: #{tpu_custom_call.1} parent=11 // pred_fallthru
          _
        // Predicated region
        $region21: #{tpu_custom_call.1} parent=11 // pred_check
          %p181 = pneg %p113
        $region22: #{tpu_custom_call.1} parent=11 // pred_check_branch
          %183 = sbr.rel (%p181) target = $region24
        $region23: #{tpu_custom_call.1} parent=11 // pred_region
          _
        $region24: #{tpu_custom_call.1} parent=11 // pred_fallthru
          _
        // Predicated region
        $region25: #{tpu_custom_call.1} parent=11 // pred_check
          %p184 = pneg %p134
        $region26: #{tpu_custom_call.1} parent=11 // pred_check_branch
          %186 = sbr.rel (%p184) target = $region28
        $region27: #{tpu_custom_call.1} parent=11 // pred_region
          _
        $region28: #{tpu_custom_call.1} parent=11 // pred_fallthru
          _
      $region12: #{tpu_custom_call.1} parent=5 // pred_fallthru
        _
      %p187 = scmp.lt.s32.totalorder %s24, 3
      // Predicated region
      $region29: #{tpu_custom_call.1} parent=5 // pred_check
        %p188 = pneg %p187
      $region30: #{tpu_custom_call.1} parent=5 // pred_check_branch
        %190 = sbr.rel (%p188) target = $region32
      $region31: #{tpu_custom_call.1} parent=5 // pred_region
        // Predicated region
        $region33: #{tpu_custom_call.1} parent=31 // pred_check
          %p191 = pneg %p44
        $region34: #{tpu_custom_call.1} parent=31 // pred_check_branch
          %193 = sbr.rel (%p191) target = $region36
        $region35: #{tpu_custom_call.1} parent=31 // pred_region
          %s194 = smul.u32 16, %s24
          %p195 = scmp.lt.s32.totalorder %s194, 47
          %s196 = scalar_select %p195, %s194, 47
          %s197 = smul.addr %s196, 8
          %s198 = scalar_lea.vmem %s1, %s197
          %s199 = smul.u32 16, %s24
        $region36: #{tpu_custom_call.1} parent=31 // pred_fallthru
          _
      $region32: #{tpu_custom_call.1} parent=5 // pred_fallthru
        _
      %p200 = scmp.le.s32.totalorder 1, %s24
      %p201 = scmp.lt.s32.totalorder %s24, 4
      %p202 = pnand %p200, %p201
      %p203 = pneg %p202
      // Predicated region
      $region37: #{tpu_custom_call.1} parent=5 // pred_check
        _
      $region38: #{tpu_custom_call.1} parent=5 // pred_check_branch
        %205 = sbr.rel (%p202) target = $region40
      $region39: #{tpu_custom_call.1} parent=5 // pred_region
        %s206 = ssub.s32 %s24, 1
        %s207 = smul.u32 16, %s29
        %p208 = scmp.lt.s32.totalorder %s207, 47
        %s209 = scalar_select %p208, %s207, 47
        %s210 = smul.addr %s209, 8
        %s211 = scalar_lea.vmem %s1, %s210
        %p212 = pneg %p50
        %p213 = pneg %p47
        %p214 = pneg %p71
        %p215 = pneg %p68
        %p216 = pneg %p92
        %p217 = pneg %p89
        %p218 = pneg %p113
        %p219 = pneg %p110
        %p220 = pneg %p134
        %p221 = pneg %p131
        %p222 = pneg %p160
        %p223 = pneg %p157
        %s224 = sand.u32 %s147, 1
        %s225 = scalar_lea.sflag [#allocation7], %s224
        %s226 = sand.u32 %s147, 1
        %s227 = smul.addr %s226, 256
        %s228 = scalar_lea.vmem [#allocation6], %s227
        %s229 = smul.u32 16, %s29
        %p230 = scmp.lt.s32.totalorder %s229, 47
        %s231 = scalar_select %p230, %s229, 47
        %s232 = smul.addr %s231, 8
        %s233 = scalar_lea.vmem %s1, %s232
        %s234 = smul.u32 16, %s29
        %s235 = smul.u32 16, %s29
        %s237 = smul.u32 %s29, 128
        loop: start=0, step=1, limit=16
        $region41: #{tpu_custom_call.1} parent=39 // loop_pre_header
          _
        $region42: #{tpu_custom_call.1} parent=39 // loop_header
          %s239 = sphi 0, %s243
          %p240 = scmp.ge.s32.totalorder %s239, 16
        $region43: #{tpu_custom_call.1} parent=39 // loop_header_branch
          %242 = sbr.rel (%p240) target = $region47
        $region44: #{tpu_custom_call.1} parent=39 // loop_body
          %s244 = sadd.s32 %s237, %s239
          %s245 = sld [smem:[#allocation5 + %s244]]
          %p246 = scmp.lt.s32.totalorder %s239, 0
          %s247 = ssub.s32 0, %s239
          %s248 = scalar_select %p246, %s247, %s239
          %s249 = sand.u32 %s248, 15
          %s250 = ssub.s32 0, %s249
          %s251 = scalar_select %p246, %s250, %s249
          %p252 = scmp.ne.s32.totalorder %s251, 0
          %p253 = scmp.lt.s32.totalorder %s251, 0
          %p254 = pnand %p253, %p252
          %p255 = pneg %p254
          %s256 = sadd.s32 %s251, 16
          %s257 = scalar_select %p255, %s256, %s251
          %s258 = scalar_lea.hbm %s6, %s245
          %s259 = scalar_lea.vmem [#allocation2], %s239
          %s260 = scalar_lea.sflag [#allocation3], %s257
          // Predicated region
          $region48: #{tpu_custom_call.1} parent=44 // pred_check
            _
          $region49: #{tpu_custom_call.1} parent=44 // pred_check_branch
            %262 = sbr.rel target = $region51
          $region50: #{tpu_custom_call.1} parent=44 // pred_region
            %263 = sst [smem:[#allocation10]] [#allocation9]
            %264 = sst [smem:[#allocation11]] [#allocation8]
          $region51: #{tpu_custom_call.1} parent=44 // pred_fallthru
            _
          %266 = shalt.err (0)
          %s268 = sshll.u32 %s258, 4
          %s269 = int_to_ptr.hbm [resolvable:$true] %s268
          %s270 = sshll.u32 %s259, 4
          %s271 = int_to_ptr.vmem [resolvable:$true] %s270
          %273 = dma.hbm_to_vmem [thread:$0]  %s269, 16, %s271, %s260
        $region45: #{tpu_custom_call.1} parent=39 // loop_footer
          %s243 = sadd.s32 1, %s239
        $region46: #{tpu_custom_call.1} parent=39 // loop_footer_branch
          %238 = sbr.rel target = $region42
        $region47: #{tpu_custom_call.1} parent=39 // loop_exit
          _
        %v274 = vld [vmem:[%s233] sm:$0xff]
        %v275 = vld [vmem:[%s233 + $0x8] sm:$0xff]
        %v276 = vld [vmem:[%s233 + $0x10] sm:$0xff]
        %v277 = vld [vmem:[%s233 + $0x18] sm:$0xff]
        %v278 = vld [vmem:[%s233 + $0x20] sm:$0xff]
        %v279 = vld [vmem:[%s233 + $0x28] sm:$0xff]
        %v280 = vld [vmem:[%s233 + $0x30] sm:$0xff]
        %v281 = vld [vmem:[%s233 + $0x38] sm:$0xff]
        %v282 = vld [vmem:[%s233 + $0x40] sm:$0xff]
        %v283 = vld [vmem:[%s233 + $0x48] sm:$0xff]
        %v284 = vld [vmem:[%s233 + $0x50] sm:$0xff]
        %v285 = vld [vmem:[%s233 + $0x58] sm:$0xff]
        %v286 = vld [vmem:[%s233 + $0x60] sm:$0xff]
        %v287 = vld [vmem:[%s233 + $0x68] sm:$0xff]
        %v288 = vld [vmem:[%s233 + $0x70] sm:$0xff]
        %v289 = vld [vmem:[%s233 + $0x78] sm:$0xff]
        %v290 = vpack.c.bf16 %v275, %v274
        %v291 = vpack.c.bf16 %v277, %v276
        %v292 = vpack.c.bf16 %v279, %v278
        %v293 = vpack.c.bf16 %v281, %v280
        %v294 = vpack.c.bf16 %v283, %v282
        %v295 = vpack.c.bf16 %v285, %v284
        %v296 = vpack.c.bf16 %v287, %v286
        %v297 = vpack.c.bf16 %v289, %v288
        %v298 = vld [vmem:[%s2] sm:$0xf]
        %v299 = vld [vmem:[%s2 + $0x4] sm:$0xf]
        %v300 = vld [vmem:[%s3] sm:$0x1]
        %v302 = vperm.slane %v300, 0
        %v306 = vunpack.c.l.b16 %v298
        %v307 = vunpack.c.l.b16 %v299
        %v308 = vpack.c.b16 %v307, %v306
        %vm310 = vcmask 130048
        %v312 = vsel %vm310, %v290, 0
        %v315 = vsel %vm310, %v291, 0
        %v318 = vsel %vm310, %v292, 0
        %v321 = vsel %vm310, %v293, 0
        %v324 = vsel %vm310, %v294, 0
        %v327 = vsel %vm310, %v295, 0
        %v330 = vsel %vm310, %v296, 0
        %v333 = vsel %vm310, %v297, 0
        %335 = vmatpush.bf16.msra.mxu0 0
        %336 = vmatpush.bf16.msra.mxu0 0
        %337 = vmatpush.bf16.msra.mxu0 0
        %338 = vmatpush.bf16.msra.mxu0 0
        %339 = vmatpush.bf16.msra.mxu0 0
        %340 = vmatpush.bf16.msra.mxu0 0
        %341 = vmatpush.bf16.msra.mxu0 0
        %342 = vmatpush.bf16.msra.mxu0 %v308
        %343 = vmatmul.bf16.gmra.mxu0 %v312
        %v344 = vpop.f32.mrf.mxu0
        %v345 = vadd.f32 %v302, %v344
        %v346 = vpop.f32.mrf.mxu0
        %v347 = vadd.f32 %v302, %v346
        %348 = vmatmul.bf16.gmra.mxu0 %v315
        %v349 = vpop.f32.mrf.mxu0
        %v350 = vadd.f32 %v302, %v349
        %v351 = vpop.f32.mrf.mxu0
        %v352 = vadd.f32 %v302, %v351
        %353 = vmatmul.bf16.gmra.mxu0 %v318
        %v354 = vpop.f32.mrf.mxu0
        %v355 = vadd.f32 %v302, %v354
        %v356 = vpop.f32.mrf.mxu0
        %v357 = vadd.f32 %v302, %v356
        %358 = vmatmul.bf16.gmra.mxu0 %v321
        %v359 = vpop.f32.mrf.mxu0
        %v360 = vadd.f32 %v302, %v359
        %v361 = vpop.f32.mrf.mxu0
        %v362 = vadd.f32 %v302, %v361
        %363 = vmatmul.bf16.gmra.mxu0 %v324
        %v364 = vpop.f32.mrf.mxu0
        %v365 = vadd.f32 %v302, %v364
        %v366 = vpop.f32.mrf.mxu0
        %v367 = vadd.f32 %v302, %v366
        %368 = vmatmul.bf16.gmra.mxu0 %v327
        %v369 = vpop.f32.mrf.mxu0
        %v370 = vadd.f32 %v302, %v369
        %v371 = vpop.f32.mrf.mxu0
        %v372 = vadd.f32 %v302, %v371
        %373 = vmatmul.bf16.gmra.mxu0 %v330
        %v374 = vpop.f32.mrf.mxu0
        %v375 = vadd.f32 %v302, %v374
        %v376 = vpop.f32.mrf.mxu0
        %v377 = vadd.f32 %v302, %v376
        %378 = vmatmul.bf16.gmra.mxu0 %v333
        %v379 = vpop.f32.mrf.mxu0
        %v380 = vadd.f32 %v302, %v379
        %v381 = vpop.f32.mrf.mxu0
        %v382 = vadd.f32 %v302, %v381
        %383 = vdwg.mxu0
        %v384 = vmax.f32 %v345, 0.0
        %v385 = vmax.f32 %v347, 0.0
        %v386 = vmax.f32 %v350, 0.0
        %v387 = vmax.f32 %v352, 0.0
        %v388 = vmax.f32 %v355, 0.0
        %v389 = vmax.f32 %v357, 0.0
        %v390 = vmax.f32 %v360, 0.0
        %v391 = vmax.f32 %v362, 0.0
        %v392 = vmax.f32 %v365, 0.0
        %v393 = vmax.f32 %v367, 0.0
        %v394 = vmax.f32 %v370, 0.0
        %v395 = vmax.f32 %v372, 0.0
        %v396 = vmax.f32 %v375, 0.0
        %v397 = vmax.f32 %v377, 0.0
        %v398 = vmax.f32 %v380, 0.0
        %v399 = vmax.f32 %v382, 0.0
        %v400 = vpack.c.bf16 %v385, %v384
        %v401 = vpack.c.bf16 %v387, %v386
        %v402 = vpack.c.bf16 %v389, %v388
        %v403 = vpack.c.bf16 %v391, %v390
        %v404 = vpack.c.bf16 %v393, %v392
        %v405 = vpack.c.bf16 %v395, %v394
        %v406 = vpack.c.bf16 %v397, %v396
        %v407 = vpack.c.bf16 %v399, %v398
        %v408 = vld [vmem:[%s4] sm:$0xf]
        %v409 = vld [vmem:[%s4 + $0x4] sm:$0xf]
        %v410 = vld [vmem:[%s4 + $0x8] sm:$0xf]
        %v411 = vld [vmem:[%s4 + $0xc] sm:$0xf]
        %v412 = vld [vmem:[%s4 + $0x10] sm:$0xf]
        %v413 = vld [vmem:[%s4 + $0x14] sm:$0xf]
        %v414 = vld [vmem:[%s4 + $0x18] sm:$0xf]
        %v415 = vld [vmem:[%s4 + $0x1c] sm:$0xf]
        %v416 = vld [vmem:[%s4 + $0x20] sm:$0xf]
        %v417 = vld [vmem:[%s4 + $0x24] sm:$0xf]
        %v418 = vld [vmem:[%s4 + $0x28] sm:$0xf]
        %v419 = vld [vmem:[%s4 + $0x2c] sm:$0xf]
        %v420 = vld [vmem:[%s4 + $0x30] sm:$0xf]
        %v421 = vld [vmem:[%s4 + $0x34] sm:$0xf]
        %v422 = vld [vmem:[%s4 + $0x38] sm:$0xf]
        %v423 = vld [vmem:[%s4 + $0x3c] sm:$0xf]
        %v424 = vld [vmem:[%s5] sm:$0x1]
        %v426 = vperm.slane %v424, 0
        %v444 = vunpack.c.l.b16 %v408
        %v445 = vunpack.c.l.b16 %v409
        %v446 = vunpack.c.l.b16 %v410
        %v447 = vunpack.c.l.b16 %v411
        %v448 = vunpack.c.l.b16 %v412
        %v449 = vunpack.c.l.b16 %v413
        %v450 = vunpack.c.l.b16 %v414
        %v451 = vunpack.c.l.b16 %v415
        %v452 = vunpack.c.l.b16 %v416
        %v453 = vunpack.c.l.b16 %v417
        %v454 = vunpack.c.l.b16 %v418
        %v455 = vunpack.c.l.b16 %v419
        %v456 = vunpack.c.l.b16 %v420
        %v457 = vunpack.c.l.b16 %v421
        %v458 = vunpack.c.l.b16 %v422
        %v459 = vunpack.c.l.b16 %v423
        %v460 = vpack.c.b16 %v445, %v444
        %v461 = vpack.c.b16 %v447, %v446
        %v462 = vpack.c.b16 %v449, %v448
        %v463 = vpack.c.b16 %v451, %v450
        %v464 = vpack.c.b16 %v453, %v452
        %v465 = vpack.c.b16 %v455, %v454
        %v466 = vpack.c.b16 %v457, %v456
        %v467 = vpack.c.b16 %v459, %v458
        %476 = vmatpush.bf16.msra.mxu0 %v467
        %477 = vmatpush.bf16.msra.mxu0 %v466
        %478 = vmatpush.bf16.msra.mxu0 %v465
        %479 = vmatpush.bf16.msra.mxu0 %v464
        %480 = vmatpush.bf16.msra.mxu0 %v463
        %481 = vmatpush.bf16.msra.mxu0 %v462
        %482 = vmatpush.bf16.msra.mxu0 %v461
        %483 = vmatpush.bf16.msra.mxu0 %v460
        %484 = vmatmul.bf16.gmra.mxu0 %v400
        %v485 = vpop.f32.mrf.mxu0
        %v486 = vadd.f32 %v426, %v485
        %v487 = vpop.f32.mrf.mxu0
        %v488 = vadd.f32 %v426, %v487
        %489 = vmatmul.bf16.gmra.mxu0 %v401
        %v490 = vpop.f32.mrf.mxu0
        %v491 = vadd.f32 %v426, %v490
        %v492 = vpop.f32.mrf.mxu0
        %v493 = vadd.f32 %v426, %v492
        %494 = vmatmul.bf16.gmra.mxu0 %v402
        %v495 = vpop.f32.mrf.mxu0
        %v496 = vadd.f32 %v426, %v495
        %v497 = vpop.f32.mrf.mxu0
        %v498 = vadd.f32 %v426, %v497
        %499 = vmatmul.bf16.gmra.mxu0 %v403
        %v500 = vpop.f32.mrf.mxu0
        %v501 = vadd.f32 %v426, %v500
        %v502 = vpop.f32.mrf.mxu0
        %v503 = vadd.f32 %v426, %v502
        %504 = vmatmul.bf16.gmra.mxu0 %v404
        %v505 = vpop.f32.mrf.mxu0
        %v506 = vadd.f32 %v426, %v505
        %v507 = vpop.f32.mrf.mxu0
        %v508 = vadd.f32 %v426, %v507
        %509 = vmatmul.bf16.gmra.mxu0 %v405
        %v510 = vpop.f32.mrf.mxu0
        %v511 = vadd.f32 %v426, %v510
        %v512 = vpop.f32.mrf.mxu0
        %v513 = vadd.f32 %v426, %v512
        %514 = vmatmul.bf16.gmra.mxu0 %v406
        %v515 = vpop.f32.mrf.mxu0
        %v516 = vadd.f32 %v426, %v515
        %v517 = vpop.f32.mrf.mxu0
        %v518 = vadd.f32 %v426, %v517
        %519 = vmatmul.bf16.gmra.mxu0 %v407
        %v520 = vpop.f32.mrf.mxu0
        %v521 = vadd.f32 %v426, %v520
        %v522 = vpop.f32.mrf.mxu0
        %v523 = vadd.f32 %v426, %v522
        %524 = vdwg.mxu0
        %v525 = vmax.f32 %v486, 0.0
        %v526 = vmax.f32 %v488, 0.0
        %v527 = vmax.f32 %v491, 0.0
        %v528 = vmax.f32 %v493, 0.0
        %v529 = vmax.f32 %v496, 0.0
        %v530 = vmax.f32 %v498, 0.0
        %v531 = vmax.f32 %v501, 0.0
        %v532 = vmax.f32 %v503, 0.0
        %v533 = vmax.f32 %v506, 0.0
        %v534 = vmax.f32 %v508, 0.0
        %v535 = vmax.f32 %v511, 0.0
        %v536 = vmax.f32 %v513, 0.0
        %v537 = vmax.f32 %v516, 0.0
        %v538 = vmax.f32 %v518, 0.0
        %v539 = vmax.f32 %v521, 0.0
        %v540 = vmax.f32 %v523, 0.0
        %541 = vst [vmem:[%s228 + $0x8] sm:$0xff] %v525
        %542 = vst [vmem:[%s228 + $0x18] sm:$0xff] %v526
        %543 = vst [vmem:[%s228 + $0x28] sm:$0xff] %v527
        %544 = vst [vmem:[%s228 + $0x38] sm:$0xff] %v528
        %545 = vst [vmem:[%s228 + $0x48] sm:$0xff] %v529
        %546 = vst [vmem:[%s228 + $0x58] sm:$0xff] %v530
        %547 = vst [vmem:[%s228 + $0x68] sm:$0xff] %v531
        %548 = vst [vmem:[%s228 + $0x78] sm:$0xff] %v532
        %549 = vst [vmem:[%s228 + $0x88] sm:$0xff] %v533
        %550 = vst [vmem:[%s228 + $0x98] sm:$0xff] %v534
        %551 = vst [vmem:[%s228 + $0xa8] sm:$0xff] %v535
        %552 = vst [vmem:[%s228 + $0xb8] sm:$0xff] %v536
        %553 = vst [vmem:[%s228 + $0xc8] sm:$0xff] %v537
        %554 = vst [vmem:[%s228 + $0xd8] sm:$0xff] %v538
        %555 = vst [vmem:[%s228 + $0xe8] sm:$0xff] %v539
        %556 = vst [vmem:[%s228 + $0xf8] sm:$0xff] %v540
        loop: start=0, step=1, limit=128
        $region52: #{tpu_custom_call.1} parent=39 // loop_pre_header
          _
        $region53: #{tpu_custom_call.1} parent=39 // loop_header
          %s558 = sphi 0, %s562
          %p559 = scmp.ge.s32.totalorder %s558, 128
        $region54: #{tpu_custom_call.1} parent=39 // loop_header_branch
          %561 = sbr.rel (%p559) target = $region58
        $region55: #{tpu_custom_call.1} parent=39 // loop_body
          %s563 = sadd.s32 %s237, %s558
          %s564 = sld [smem:[#allocation5 + %s563]]
          %p565 = scmp.lt.s32.totalorder %s558, 0
          %s566 = ssub.s32 0, %s558
          %s567 = scalar_select %p565, %s566, %s558
          %s568 = sand.u32 %s567, 15
          %s569 = ssub.s32 0, %s568
          %s570 = scalar_select %p565, %s569, %s568
          %p571 = scmp.ne.s32.totalorder %s570, 0
          %p572 = scmp.lt.s32.totalorder %s570, 0
          %p573 = pnand %p572, %p571
          %p574 = pneg %p573
          %s575 = sadd.s32 %s570, 16
          %s576 = scalar_select %p574, %s575, %s570
          %s577 = scalar_lea.sflag [#allocation3], %s576
          %579 = dma.done %s577, 16
          %s580 = sadd.s32 %s558, 16
          %p581 = scmp.lt.s32.totalorder %s580, 128
          // Predicated region
          $region59: #{tpu_custom_call.1} parent=55 // pred_check
            %p582 = pneg %p581
          $region60: #{tpu_custom_call.1} parent=55 // pred_check_branch
            %584 = sbr.rel (%p582) target = $region62
          $region61: #{tpu_custom_call.1} parent=55 // pred_region
            %s585 = sadd.s32 %s237, %s580
            %s586 = sld [smem:[#allocation5 + %s585]]
            %p587 = scmp.lt.s32.totalorder %s580, 0
            %s588 = ssub.s32 0, %s580
            %s589 = scalar_select %p587, %s588, %s580
            %s590 = sand.u32 %s589, 15
            %s591 = ssub.s32 0, %s590
            %s592 = scalar_select %p587, %s591, %s590
            %p593 = scmp.ne.s32.totalorder %s592, 0
            %p594 = scmp.lt.s32.totalorder %s592, 0
            %p595 = pnand %p594, %p593
            %p596 = pneg %p595
            %s597 = sadd.s32 %s592, 16
            %s598 = scalar_select %p596, %s597, %s592
            %s599 = scalar_lea.hbm %s6, %s586
            %s600 = scalar_lea.vmem [#allocation2], %s580
            %s601 = scalar_lea.sflag [#allocation3], %s598
            // Predicated region
            $region63: #{tpu_custom_call.1} parent=61 // pred_check
              _
            $region64: #{tpu_custom_call.1} parent=61 // pred_check_branch
              %603 = sbr.rel target = $region66
            $region65: #{tpu_custom_call.1} parent=61 // pred_region
              %604 = sst [smem:[#allocation10]] [#allocation13]
              %605 = sst [smem:[#allocation11]] [#allocation12]
            $region66: #{tpu_custom_call.1} parent=61 // pred_fallthru
              _
            %607 = shalt.err (0)
            %s609 = sshll.u32 %s599, 4
            %s610 = int_to_ptr.hbm [resolvable:$true] %s609
            %s611 = sshll.u32 %s600, 4
            %s612 = int_to_ptr.vmem [resolvable:$true] %s611
            %614 = dma.hbm_to_vmem [thread:$0]  %s610, 16, %s612, %s601
          $region62: #{tpu_custom_call.1} parent=55 // pred_fallthru
            _
        $region56: #{tpu_custom_call.1} parent=39 // loop_footer
          %s562 = sadd.s32 1, %s558
        $region57: #{tpu_custom_call.1} parent=39 // loop_footer_branch
          %557 = sbr.rel target = $region53
        $region58: #{tpu_custom_call.1} parent=39 // loop_exit
          _
        %v615 = vld [vmem:[#allocation2] sm:$0xff]
        %v616 = vld [vmem:[#allocation2 + $0x8] sm:$0xff]
        %v617 = vld [vmem:[#allocation2 + $0x10] sm:$0xff]
        %v618 = vld [vmem:[#allocation2 + $0x18] sm:$0xff]
        %v619 = vld [vmem:[#allocation2 + $0x20] sm:$0xff]
        %v620 = vld [vmem:[#allocation2 + $0x28] sm:$0xff]
        %v621 = vld [vmem:[#allocation2 + $0x30] sm:$0xff]
        %v622 = vld [vmem:[#allocation2 + $0x38] sm:$0xff]
        %v623 = vld [vmem:[#allocation2 + $0x40] sm:$0xff]
        %v624 = vld [vmem:[#allocation2 + $0x48] sm:$0xff]
        %v625 = vld [vmem:[#allocation2 + $0x50] sm:$0xff]
        %v626 = vld [vmem:[#allocation2 + $0x58] sm:$0xff]
        %v627 = vld [vmem:[#allocation2 + $0x60] sm:$0xff]
        %v628 = vld [vmem:[#allocation2 + $0x68] sm:$0xff]
        %v629 = vld [vmem:[#allocation2 + $0x70] sm:$0xff]
        %v630 = vld [vmem:[#allocation2 + $0x78] sm:$0xff]
        %631 = vst [vmem:[%s228] sm:$0xff] %v615
        %632 = vst [vmem:[%s228 + $0x10] sm:$0xff] %v616
        %633 = vst [vmem:[%s228 + $0x20] sm:$0xff] %v617
        %634 = vst [vmem:[%s228 + $0x30] sm:$0xff] %v618
        %635 = vst [vmem:[%s228 + $0x40] sm:$0xff] %v619
        %636 = vst [vmem:[%s228 + $0x50] sm:$0xff] %v620
        %637 = vst [vmem:[%s228 + $0x60] sm:$0xff] %v621
        %638 = vst [vmem:[%s228 + $0x70] sm:$0xff] %v622
        %639 = vst [vmem:[%s228 + $0x80] sm:$0xff] %v623
        %640 = vst [vmem:[%s228 + $0x90] sm:$0xff] %v624
        %641 = vst [vmem:[%s228 + $0xa0] sm:$0xff] %v625
        %642 = vst [vmem:[%s228 + $0xb0] sm:$0xff] %v626
        %643 = vst [vmem:[%s228 + $0xc0] sm:$0xff] %v627
        %644 = vst [vmem:[%s228 + $0xd0] sm:$0xff] %v628
        %645 = vst [vmem:[%s228 + $0xe0] sm:$0xff] %v629
        %646 = vst [vmem:[%s228 + $0xf0] sm:$0xff] %v630
        %s647 = sand.u32 %s147, 1
        %s648 = scalar_lea.sflag [#allocation7], %s647
        %s649 = sand.u32 %s147, 1
        %s650 = smul.addr %s649, 256
        %s651 = scalar_lea.vmem [#allocation6], %s650
        // Predicated region
        $region67: #{tpu_custom_call.1} parent=39 // pred_check
          %p652 = pneg %p157
        $region68: #{tpu_custom_call.1} parent=39 // pred_check_branch
          %654 = sbr.rel (%p652) target = $region70
        $region69: #{tpu_custom_call.1} parent=39 // pred_region
          %s655 = smul.u32 16, %s29
          %657 = vsyncadd %s648, 0
          %s658 = smul.addr %s655, 2
          %s659 = smul.addr %s658, 8
          %s660 = scalar_lea.hbm %s7, %s659
          %s661 = sshll.u32 %s651, 4
          %s662 = int_to_ptr.vmem [resolvable:$true] %s661
          %s663 = sshll.u32 %s660, 4
          %s664 = int_to_ptr.hbm [resolvable:$true] %s663
          %669 = dma.vmem_to_hbm [thread:$0]  %s662, 4096, %s664, %s648, 256, 256, 16
        $region70: #{tpu_custom_call.1} parent=39 // pred_fallthru
          _
      $region40: #{tpu_custom_call.1} parent=5 // pred_fallthru
        _
      %p670 = scmp.le.s32.totalorder 2, %s24
      // Predicated region
      $region71: #{tpu_custom_call.1} parent=5 // pred_check
        %p671 = pneg %p670
      $region72: #{tpu_custom_call.1} parent=5 // pred_check_branch
        %673 = sbr.rel (%p671) target = $region74
      $region73: #{tpu_custom_call.1} parent=5 // pred_region
        %s674 = ssub.s32 %s24, 2
        // Predicated region
        $region75: #{tpu_custom_call.1} parent=73 // pred_check
          %p675 = pneg %p163
        $region76: #{tpu_custom_call.1} parent=73 // pred_check_branch
          %677 = sbr.rel (%p675) target = $region78
        $region77: #{tpu_custom_call.1} parent=73 // pred_region
          %s678 = sand.u32 %s148, 1
          %s679 = scalar_lea.sflag [#allocation7], %s678
          %s680 = sand.u32 %s148, 1
          %s681 = smul.addr %s680, 256
          %s682 = scalar_lea.vmem [#allocation6], %s681
          %684 = dma.done %s679, 4096
        $region78: #{tpu_custom_call.1} parent=73 // pred_fallthru
          _
      $region74: #{tpu_custom_call.1} parent=5 // pred_fallthru
        _
    $region6: #{tpu_custom_call.1} parent=1 // loop_footer
      %s28 = sadd.s32 1, %s24
    $region7: #{tpu_custom_call.1} parent=1 // loop_footer_branch
      %23 = sbr.rel target = $region3
    $region8: #{tpu_custom_call.1} parent=1 // loop_exit
      _
    %685 = vsyncpa [#allocation7], 1
    %s686 = scalar_lea.sflag [#allocation7], 1
    %687 = vsyncpa %s686, 1
  %688 = vsyncmov [#allocation3]
  %s689 = vpop.sfrf %688
  %p690 = scmp.eq.s32.totalorder %s689, 0
  %p691 = pneg %p690
  %693 = shalt.err (%p691)
  %s694 = scalar_lea.sflag [#allocation3], 1
  %695 = vsyncmov %s694
  %s696 = vpop.sfrf %695
  %p697 = scmp.eq.s32.totalorder %s696, 0
  %p698 = pneg %p697
  %700 = shalt.err (%p698)
  %s701 = scalar_lea.sflag [#allocation3], 2
  %702 = vsyncmov %s701
  %s703 = vpop.sfrf %702
  %p704 = scmp.eq.s32.totalorder %s703, 0
  %p705 = pneg %p704
  %707 = shalt.err (%p705)
  %s708 = scalar_lea.sflag [#allocation3], 3
  %709 = vsyncmov %s708
  %s710 = vpop.sfrf %709
  %p711 = scmp.eq.s32.totalorder %s710, 0
  %p712 = pneg %p711
  %714 = shalt.err (%p712)
  %s715 = scalar_lea.sflag [#allocation3], 4
  %716 = vsyncmov %s715
  %s717 = vpop.sfrf %716
  %p718 = scmp.eq.s32.totalorder %s717, 0
  %p719 = pneg %p718
  %721 = shalt.err (%p719)
  %s722 = scalar_lea.sflag [#allocation3], 5
  %723 = vsyncmov %s722
  %s724 = vpop.sfrf %723
  %p725 = scmp.eq.s32.totalorder %s724, 0
  %p726 = pneg %p725
  %728 = shalt.err (%p726)
  %s729 = scalar_lea.sflag [#allocation3], 6
  %730 = vsyncmov %s729
  %s731 = vpop.sfrf %730
  %p732 = scmp.eq.s32.totalorder %s731, 0
  %p733 = pneg %p732
  %735 = shalt.err (%p733)
  %s736 = scalar_lea.sflag [#allocation3], 7
  %737 = vsyncmov %s736
  %s738 = vpop.sfrf %737
  %p739 = scmp.eq.s32.totalorder %s738, 0
  %p740 = pneg %p739
  %742 = shalt.err (%p740)
  %s743 = scalar_lea.sflag [#allocation3], 8
  %744 = vsyncmov %s743
  %s745 = vpop.sfrf %744
  %p746 = scmp.eq.s32.totalorder %s745, 0
  %p747 = pneg %p746
  %749 = shalt.err (%p747)
  %s750 = scalar_lea.sflag [#allocation3], 9
  %751 = vsyncmov %s750
  %s752 = vpop.sfrf %751
  %p753 = scmp.eq.s32.totalorder %s752, 0
  %p754 = pneg %p753
  %756 = shalt.err (%p754)
  %s757 = scalar_lea.sflag [#allocation3], 10
  %758 = vsyncmov %s757
  %s759 = vpop.sfrf %758
  %p760 = scmp.eq.s32.totalorder %s759, 0
  %p761 = pneg %p760
  %763 = shalt.err (%p761)
  %s764 = scalar_lea.sflag [#allocation3], 11
  %765 = vsyncmov %s764
  %s766 = vpop.sfrf %765
  %p767 = scmp.eq.s32.totalorder %s766, 0
  %p768 = pneg %p767
  %770 = shalt.err (%p768)
  %s771 = scalar_lea.sflag [#allocation3], 12
  %772 = vsyncmov %s771
  %s773 = vpop.sfrf %772
  %p774 = scmp.eq.s32.totalorder %s773, 0
  %p775 = pneg %p774
  %777 = shalt.err (%p775)
  %s778 = scalar_lea.sflag [#allocation3], 13
  %779 = vsyncmov %s778
  %s780 = vpop.sfrf %779
  %p781 = scmp.eq.s32.totalorder %s780, 0
  %p782 = pneg %p781
  %784 = shalt.err (%p782)
  %s785 = scalar_lea.sflag [#allocation3], 14
  %786 = vsyncmov %s785
  %s787 = vpop.sfrf %786
  %p788 = scmp.eq.s32.totalorder %s787, 0
  %p789 = pneg %p788
  %791 = shalt.err (%p789)
  %s792 = scalar_lea.sflag [#allocation3], 15
  %793 = vsyncmov %s792
  %s794 = vpop.sfrf %793
  %p795 = scmp.eq.s32.totalorder %s794, 0
  %p796 = pneg %p795
  %798 = shalt.err (%p796)

</llo_original>
